<compile_context>
chip_gen: v6e
topology: v6e:2x2x1
jax: 0.10.0
libtpu: 0.0.40
codegen_flags: <defaults>
</compile_context>

<pallas_src>
import functools

import jax
import jax.numpy as jnp
from jax.experimental import pallas as pl
from jax.experimental.pallas import tpu as pltpu

NEG_SLOPE = 0.2          # LeakyReLU(0.2)
BF16 = jnp.bfloat16
LANE = 128


def _round_up(x, m):
    return (x + m - 1) // m * m


# ----------------------------------------------------------------------------
# "padded-flat" activation layout helpers (plain-JAX glue, layout only)
#   (B, C, H, W)  <->  (B, C, Nl)   with a 1-px zero ring folded in and the
#   flattened spatial axis padded to a multiple of 128 lanes.
# ----------------------------------------------------------------------------
def to_flat(x, dtype=BF16):
    B, C, H, W = x.shape
    hp, wp = H + 2, W + 2
    nl = _round_up(hp * wp, LANE)
    xp = jnp.pad(x, ((0, 0), (0, 0), (1, 1), (1, 1))).reshape(B, C, hp * wp)
    xp = jnp.pad(xp, ((0, 0), (0, 0), (0, nl - hp * wp)))
    return xp.astype(dtype)


def from_flat(xf, H, W):
    B, C, _ = xf.shape
    hp, wp = H + 2, W + 2
    x = xf[:, :, :hp * wp].reshape(B, C, hp, wp)
    return x[:, :, 1:H + 1, 1:W + 1]


def make_mask(H, W):
    """1.0 on interior pixels, 0.0 on the zero-pad ring / lane tail."""
    hp, wp = H + 2, W + 2
    nl = _round_up(hp * wp, LANE)
    m = jnp.zeros((hp, wp), jnp.float32).at[1:H + 1, 1:W + 1].set(1.0)
    m = jnp.pad(m.reshape(hp * wp), (0, nl - hp * wp))
    return m.reshape(1, nl)


def pixel_shuffle_nchw(x, r):
    """PyTorch nn.PixelShuffle semantics on NCHW."""
    B, C, H, W = x.shape
    c = C // (r * r)
    x = x.reshape(B, c, r, r, H, W)
    x = jnp.transpose(x, (0, 1, 4, 2, 5, 3))
    return x.reshape(B, c, H * r, W * r)


# ----------------------------------------------------------------------------
# Pallas kernel: fused grouped conv (3x3 or 1x1) in the padded-flat layout
#   out[br, b] = leaky( sum_src sum_tap W_tap @ shift(x_src) + bias ) * mask
#                (+ optional residual)
# ----------------------------------------------------------------------------
def _shift_lanes(x, delta):
    """y[:, f] = x[:, f + delta] with zero fill at the ends (delta: python int)."""
    if delta == 0:
        return x
    c, _ = x.shape
    z = jnp.zeros((c, abs(delta)), x.dtype)
    if delta > 0:
        return jnp.concatenate([x[:, delta:], z], axis=1)
    return jnp.concatenate([z, x[:, :delta]], axis=1)


@functools.lru_cache(maxsize=None)
def _build_fused_conv(modes, dshapes, wshapes, cout, nb, batch, wp, nl,
                      ksize, act, has_res):
    nsrc = len(modes)
    taps = ([(dy, dx) for dy in (-1, 0, 1) for dx in (-1, 0, 1)]
            if ksize == 3 else [(0, 0)])

    def kernel(*refs):
        d_refs = refs[:nsrc]
        w_refs = refs[nsrc:2 * nsrc]
        b_ref = refs[2 * nsrc]
        m_ref = refs[2 * nsrc + 1]
        r_ref = refs[2 * nsrc + 2] if has_res else None
        o_ref = refs[-1]

        acc = jnp.zeros((cout, nl), jnp.float32)
        for si in range(nsrc):
            mode = modes[si]
            dref, wref = d_refs[si], w_refs[si]
            nseg = dshapes[si][0] if mode == "segment" else 1
            for g in range(nseg):
                if mode == "branch":
                    xs = dref[0, 0]
                elif mode == "shared":
                    xs = dref[0]
                else:                                  # "segment"
                    xs = dref[g, 0]
                widx = g if mode == "segment" else 0
                for dy, dx in taps:
                    xr = _shift_lanes(xs, dy * wp + dx)
                    wtap = (wref[widx, dy + 1, dx + 1] if ksize == 3
                            else wref[widx, 0, 0])
                    acc = acc + jnp.dot(wtap, xr,
                                        preferred_element_type=jnp.float32)
        acc = acc + b_ref[0]
        if act:
            acc = jnp.where(acc >= 0.0, acc, NEG_SLOPE * acc)
        acc = acc * m_ref[...]            # re-zero the pad ring / lane tail
        if has_res:
            acc = acc + r_ref[0, 0].astype(jnp.float32)
        o_ref[0, 0] = acc.astype(o_ref.dtype)

    in_specs = []
    for mode, ds in zip(modes, dshapes):
        if mode == "branch":              # (nb, B, Ci, Nl)
            in_specs.append(pl.BlockSpec((1, 1, ds[2], ds[3]),
                                         lambda br, b: (br, b, 0, 0)))
        elif mode == "shared":            # (B, Ci, Nl)
            in_specs.append(pl.BlockSpec((1, ds[1], ds[2]),
                                         lambda br, b: (b, 0, 0)))
        else:                             # "segment": (G, B, Ci, Nl)
            in_specs.append(pl.BlockSpec((ds[0], 1, ds[2], ds[3]),
                                         lambda br, b: (0, b, 0, 0)))
    for mode, ws in zip(modes, wshapes):
        if mode == "segment":             # (G, K, K, Cout, Ci): one full block
            in_specs.append(pl.BlockSpec(ws,
                                         lambda br, b, nd=len(ws): (0,) * nd))
        else:                             # (nb, K, K, Cout, Ci)
            in_specs.append(pl.BlockSpec(
                (1,) + ws[1:],
                lambda br, b, nd=len(ws): (br,) + (0,) * (nd - 1)))
    in_specs.append(pl.BlockSpec((1, cout, 1), lambda br, b: (br, 0, 0)))  # bias
    in_specs.append(pl.BlockSpec((1, nl), lambda br, b: (0, 0)))           # mask
    if has_res:
        in_specs.append(pl.BlockSpec((1, 1, cout, nl),
                                     lambda br, b: (br, b, 0, 0)))

    f = pl.pallas_call(
        kernel,
        out_shape=jax.ShapeDtypeStruct((nb, batch, cout, nl), BF16),
        grid_spec=pltpu.PrefetchScalarGridSpec(
            num_scalar_prefetch=0,
            grid=(nb, batch),
            in_specs=in_specs,
            out_specs=pl.BlockSpec((1, 1, cout, nl),
                                   lambda br, b: (br, b, 0, 0)),
        ),
        compiler_params=pltpu.CompilerParams(
            dimension_semantics=("parallel", "parallel"),
            vmem_limit_bytes=48 * 1024 * 1024,
        ),
    )
    return jax.jit(f)


def fused_conv(sources, bias, mask, *, nb, wp, ksize, act, residual=None):
    """Fused grouped conv in the padded-flat layout.

    sources: list of (mode, data, weight) with
      'branch' : data (nb, B, Ci, Nl), weight (nb, K, K, Cout, Ci)
      'shared' : data (B,  Ci, Nl),    weight (nb, K, K, Cout, Ci)
      'segment': data (G, B, Ci, Nl),  weight (G,  K, K, Cout, Ci)  (nb == 1)
    bias: (nb, Cout) f32;  mask: (1, Nl) f32;  residual: None or (nb, B, Cout, Nl)
    returns (nb, B, Cout, Nl) bf16.
    """
    modes = tuple(m for m, _, _ in sources)
    datas = [d.astype(BF16) for _, d, _ in sources]
    weights = [w.astype(BF16) for _, _, w in sources]
    cout = bias.shape[-1]
    nl = mask.shape[-1]
    batch = datas[0].shape[0] if modes[0] == "shared" else datas[0].shape[1]
    args = datas + weights + [bias.reshape(nb, cout, 1).astype(jnp.float32),
                              mask.astype(jnp.float32)]
    if residual is not None:
        args.append(residual.astype(BF16))
    f = _build_fused_conv(
        modes,
        tuple(tuple(d.shape) for d in datas),
        tuple(tuple(w.shape) for w in weights),
        int(cout), int(nb), int(batch), int(wp), int(nl),
        int(ksize), bool(act), residual is not None)
    return f(*args)


# ----------------------------------------------------------------------------
# Module forwards (PFRB / UPSCALE / UNIT / Net)
# ----------------------------------------------------------------------------
def pfrb_forward(bp, inp, mask, wp):
    """inp: (3, B, bf, Nl) -> (3, B, bf, Nl)."""
    x1 = fused_conv([("branch", inp, bp["w0"])], bp["b0"], mask,
                    nb=3, wp=wp, ksize=3, act=True)
    base = fused_conv([("segment", x1, bp["w1"])], bp["b1"], mask,
                      nb=1, wp=wp, ksize=1, act=True)[0]          # (B, bf, Nl)
    out = fused_conv([("shared", base, bp["w2_base"]),
                      ("branch", x1, bp["w2_x1"])], bp["b2"], mask,
                     nb=3, wp=wp, ksize=3, act=True, residual=inp)
    return out


def upscale_forward(up, ht, mask, mask2, H, W):
    """ht: (B, bf, Nl) -> SR frame (B, 3, 4H, 4W)."""
    x = fused_conv([("shared", ht, up["w1"])], up["b1"], mask,
                   nb=1, wp=W + 2, ksize=3, act=True)[0]          # (B, 48, Nl)
    x = pixel_shuffle_nchw(from_flat(x, H, W), 2)                 # (B, 12, 2H, 2W)
    x = to_flat(x)
    x = fused_conv([("shared", x, up["w2"])], up["b2"], mask2,
                   nb=1, wp=2 * W + 2, ksize=3, act=False)[0]     # (B, 12, Nl2)
    x = pixel_shuffle_nchw(from_flat(x, 2 * H, 2 * W), 2)         # (B, 3, 4H, 4W)
    return x


def unit_forward(pp, kind, it, ht_past, ht_now=None, ht_future=None, *,
                 mask, mask2, H, W):
    """it: (B, 3, T, H, W) raw frames; ht_*: (B, bf, Nl) padded-flat bf16."""
    B, C, T = it.shape[0], it.shape[1], it.shape[2]
    wp = W + 2
    if kind == "precursor":
        it_c = to_flat(it[:, :, T // 2])                          # (B, 3, Nl)
        idx_sup = [i for i in range(T) if i != T // 2]
        it_sup = it[:, :, idx_sup].reshape(B, C * (T - 1), H, W)  # matches .view
        it_sup = to_flat(it_sup)                                  # (B, 6, Nl)
        it_c = jnp.pad(it_c, ((0, 0), (0, C * (T - 1) - C), (0, 0)))
        src = jnp.stack([it_c, it_sup], axis=0)                   # (2, B, 6, Nl)
        h2 = fused_conv([("branch", src, pp["wc"])], pp["bc"], mask,
                        nb=2, wp=wp, ksize=3, act=True)           # [hc, hsup]
        inp = jnp.concatenate([h2, ht_past[None]], axis=0)        # (3, B, bf, Nl)
    else:
        frames = jnp.stack([to_flat(it[:, :, i]) for i in range(3)], axis=0)
        hts = jnp.stack([ht_past, ht_now, ht_future], axis=0)
        inp = fused_conv([("branch", frames, pp["wc_f"]),
                          ("branch", hts, pp["wc_h"])], pp["bc"], mask,
                         nb=3, wp=wp, ksize=3, act=True)          # (3, B, bf, Nl)
    for bp in pp["blocks"]:
        inp = pfrb_forward(bp, inp, mask, wp)
    ht_out = fused_conv([("segment", inp, pp["merge_w"])], pp["merge_b"], mask,
                        nb=1, wp=wp, ksize=3, act=False)[0]       # (B, bf, Nl)
    it_sr = upscale_forward(pp["upscale"], ht_out, mask, mask2, H, W)
    return it_sr, ht_out


def generate_it(x, t, nf, T):
    index = [min(max(t - nf // 2 + i, 0), T - 1) for i in range(nf)]
    return jnp.stack([x[:, :, i] for i in index], axis=2)


def net_forward(prep, x, start=0, kind="local", bf=16, nf=3):
    B, C, T, H, W = x.shape
    start = max(0, start)
    end = T - start
    nl = _round_up((H + 2) * (W + 2), LANE)
    mask = make_mask(H, W)
    mask2 = make_mask(2 * H, 2 * W)

    sr_all, pre_sr_all, pre_ht_all = [], [], []

    # precursor pass
    ht_past = jnp.zeros((B, bf, nl), BF16)
    for idx in range(T):
        t = idx if kind == "local" else T - idx - 1
        it = generate_it(x, t, nf, T)
        it_sr_pre, ht_past = unit_forward(prep["precursor"], "precursor", it,
                                          ht_past, mask=mask, mask2=mask2,
                                          H=H, W=W)
        if kind == "local":
            pre_ht_all.append(ht_past)
            pre_sr_all.append(it_sr_pre)
        else:
            pre_ht_all.insert(0, ht_past)
            pre_sr_all.insert(0, it_sr_pre)

    # successor pass
    ht_past = jnp.zeros((B, bf, nl), BF16)
    for t in range(end):
        it = generate_it(x, t, nf, T)
        ht_future = pre_ht_all[t] if t == T - 1 else pre_ht_all[t + 1]
        it_sr, ht_past = unit_forward(prep["successor"], "successor", it,
                                      ht_past, pre_ht_all[t], ht_future,
                                      mask=mask, mask2=mask2, H=H, W=W)
        sr_all.append(it_sr + pre_sr_all[t])

    sr = jnp.stack(sr_all, axis=2)[:, :, start:].astype(jnp.float32)
    pre = jnp.stack(pre_sr_all, axis=2)[:, :, start:end].astype(jnp.float32)
    return sr, pre


# ----------------------------------------------------------------------------
# Parameter init (PyTorch Conv2d layout / bounds) and kernel-layout prep
# ----------------------------------------------------------------------------
def _conv_params(key, cout, cin, k):
    kw, kb = jax.random.split(key)
    bound = 1.0 / ((cin * k * k) ** 0.5)
    w = jax.random.uniform(kw, (cout, cin, k, k), jnp.float32, -bound, bound)
    b = jax.random.uniform(kb, (cout,), jnp.float32, -bound, bound)
    return w, b


def init_unit(key, kind, bf, nf, num_b):
    keys = iter(jax.random.split(key, 256))
    p = {}
    if kind == "precursor":
        p["conv_c_w"], p["conv_c_b"] = _conv_params(next(keys), bf, 3, 3)
        p["conv_sup_w"], p["conv_sup_b"] = _conv_params(next(keys), bf, 3 * (nf - 1), 3)
    else:
        ws, bs = [], []
        for _ in range(nf):
            w, b = _conv_params(next(keys), bf, 3 + bf, 3)
            ws.append(w)
            bs.append(b)
        p["conv_c_w"], p["conv_c_b"] = ws, bs
    blocks = []
    for _ in range(num_b):
        bp = {"conv0_w": [], "conv0_b": [], "conv2_w": [], "conv2_b": []}
        for _ in range(3):
            w, b = _conv_params(next(keys), bf, bf, 3)
            bp["conv0_w"].append(w)
            bp["conv0_b"].append(b)
        bp["conv1_w"], bp["conv1_b"] = _conv_params(next(keys), bf, 3 * bf, 1)
        for _ in range(3):
            w, b = _conv_params(next(keys), bf, 2 * bf, 3)
            bp["conv2_w"].append(w)
            bp["conv2_b"].append(b)
        blocks.append(bp)
    p["blocks"] = blocks
    p["merge_w"], p["merge_b"] = _conv_params(next(keys), bf, 3 * bf, 3)
    up = {}
    up["w1"], up["b1"] = _conv_params(next(keys), 48, bf, 3)
    up["w2"], up["b2"] = _conv_params(next(keys), 12, 12, 3)
    p["upscale"] = up
    return p


def _kkcoci(w):
    """(Cout, Cin, K, K) -> (K, K, Cout, Cin) bf16 (kernel weight layout)."""
    return jnp.transpose(w, (2, 3, 0, 1)).astype(BF16)


def prep_unit(p, kind, bf, nf):
    q = {}
    if kind == "precursor":
        wc = jnp.pad(p["conv_c_w"], ((0, 0), (0, 3 * (nf - 1) - 3), (0, 0), (0, 0)))
        q["wc"] = jnp.stack([_kkcoci(wc), _kkcoci(p["conv_sup_w"])], axis=0)
        q["bc"] = jnp.stack([p["conv_c_b"], p["conv_sup_b"]], axis=0)
    else:
        q["wc_f"] = jnp.stack([_kkcoci(w[:, :3]) for w in p["conv_c_w"]], axis=0)
        q["wc_h"] = jnp.stack([_kkcoci(w[:, 3:]) for w in p["conv_c_w"]], axis=0)
        q["bc"] = jnp.stack(p["conv_c_b"], axis=0)
    blocks = []
    for bp in p["blocks"]:
        qb = {}
        qb["w0"] = jnp.stack([_kkcoci(w) for w in bp["conv0_w"]], axis=0)
        qb["b0"] = jnp.stack(bp["conv0_b"], axis=0)
        w1 = bp["conv1_w"]
        qb["w1"] = jnp.stack([_kkcoci(w1[:, g * bf:(g + 1) * bf]) for g in range(3)],
                             axis=0)
        qb["b1"] = bp["conv1_b"].reshape(1, bf)
        qb["w2_base"] = jnp.stack([_kkcoci(w[:, :bf]) for w in bp["conv2_w"]], axis=0)
        qb["w2_x1"] = jnp.stack([_kkcoci(w[:, bf:]) for w in bp["conv2_w"]], axis=0)
        qb["b2"] = jnp.stack(bp["conv2_b"], axis=0)
        blocks.append(qb)
    q["blocks"] = blocks
    wm = p["merge_w"]
    q["merge_w"] = jnp.stack([_kkcoci(wm[:, g * bf:(g + 1) * bf]) for g in range(3)],
                             axis=0)
    q["merge_b"] = p["merge_b"].reshape(1, bf)
    q["upscale"] = {
        "w1": _kkcoci(p["upscale"]["w1"])[None],
        "b1": p["upscale"]["b1"].reshape(1, 48),
        "w2": _kkcoci(p["upscale"]["w2"])[None],
        "b2": p["upscale"]["b2"].reshape(1, 12),
    }
    return q


# ----------------------------------------------------------------------------
if __name__ == "__main__":
    key = jax.random.PRNGKey(0)
    k_x, k_pre, k_suc = jax.random.split(key, 3)

    # small config: basic_filter=16, num_pb=num_sb=1, num_frame=3, scale=4
    B, C, T, H, W = 2, 3, 3, 8, 8
    bf, nf, num_pb, num_sb, scale, kind = 16, 3, 1, 1, 4, "local"

    x = jax.random.normal(k_x, (B, C, T, H, W), jnp.float32)
    params = {
        "precursor": init_unit(k_pre, "precursor", bf, nf, num_pb),
        "successor": init_unit(k_suc, "successor", bf, nf, num_sb),
    }
    prep = {
        "precursor": prep_unit(params["precursor"], "precursor", bf, nf),
        "successor": prep_unit(params["successor"], "successor", bf, nf),
    }

    sr, pre_sr = net_forward(prep, x, start=0, kind=kind, bf=bf, nf=nf)
    sr = jax.block_until_ready(sr)
    pre_sr = jax.block_until_ready(pre_sr)

    assert sr.shape == (B, 3, T, H * scale, W * scale), sr.shape
    assert pre_sr.shape == (B, 3, T, H * scale, W * scale), pre_sr.shape
    assert sr.dtype == jnp.float32 and pre_sr.dtype == jnp.float32
    assert bool(jnp.all(jnp.isfinite(sr))) and bool(jnp.all(jnp.isfinite(pre_sr)))
    print("KERNEL_OK")
</pallas_src>

<mosaic_0001>
module attributes {stable_mosaic.version = 11 : i64} {
  func.func @kernel(%arg0: i32, %arg1: i32, %arg2: memref<1x1x6x128xbf16, #tpu.memory_space<vmem>>, %arg3: memref<1x3x3x16x6xbf16, #tpu.memory_space<vmem>>, %arg4: memref<1x16x1xf32, #tpu.memory_space<vmem>>, %arg5: memref<1x128xf32, #tpu.memory_space<vmem>>, %arg6: memref<1x1x16x128xbf16, #tpu.memory_space<vmem>>) attributes {dimension_semantics = [#tpu.dimension_semantics<parallel>, #tpu.dimension_semantics<parallel>], iteration_bounds = array<i64: 2, 2>, scalar_prefetch = 0 : i64, scratch_operands = 0 : i64, tpu.core_type = #tpu.core_type<tc>, window_params = [{transform_indices = @transform_0, window_bounds = array<i64: 1, 1, 6, 128>}, {transform_indices = @transform_1, window_bounds = array<i64: 1, 3, 3, 16, 6>}, {transform_indices = @transform_2, window_bounds = array<i64: 1, 16, 1>}, {pipeline_mode = #tpu.pipeline_mode<synchronous>, transform_indices = @transform_3, window_bounds = array<i64: 1, 128>}, {transform_indices = @transform_4, window_bounds = array<i64: 1, 1, 16, 128>}]} {
    %cst = arith.constant 0.000000e+00 : f32
    %0 = vector.broadcast %cst : f32 to vector<16x128xf32>
    %c0 = arith.constant 0 : index
    %c0_0 = arith.constant 0 : index
    %c0_1 = arith.constant 0 : index
    %c0_2 = arith.constant 0 : index
    %1 = vector.load %arg2[%c0, %c0_0, %c0_1, %c0_2] : memref<1x1x6x128xbf16, #tpu.memory_space<vmem>>, vector<1x1x6x128xbf16>
    %2 = vector.shape_cast %1 : vector<1x1x6x128xbf16> to vector<6x128xbf16>
    %cst_3 = arith.constant 0.000000e+00 : bf16
    %3 = vector.broadcast %cst_3 : bf16 to vector<6x11xbf16>
    %4 = vector.extract_strided_slice %2 {offsets = [0, 0], sizes = [6, 117], strides = [1, 1]} : vector<6x128xbf16> to vector<6x117xbf16>
    %5 = tpu.concatenate %3, %4 in 1 : vector<6x11xbf16>, vector<6x117xbf16> -> vector<6x128xbf16>
    %c0_4 = arith.constant 0 : index
    %c0_5 = arith.constant 0 : index
    %c0_6 = arith.constant 0 : index
    %c0_7 = arith.constant 0 : index
    %c0_8 = arith.constant 0 : index
    %6 = vector.load %arg3[%c0_4, %c0_5, %c0_6, %c0_7, %c0_8] : memref<1x3x3x16x6xbf16, #tpu.memory_space<vmem>>, vector<1x1x1x16x6xbf16>
    %7 = vector.shape_cast %6 : vector<1x1x1x16x6xbf16> to vector<16x6xbf16>
    %cst_9 = arith.constant dense<0.000000e+00> : vector<16x128xf32>
    %8 = tpu.matmul %7, %5, %cst_9 {dimension_numbers = #tpu.dot_dimension_numbers<[1], [0], [0], [1], [0, 0, 1, 1], [], []>} : vector<16x6xbf16>, vector<6x128xbf16>, vector<16x128xf32> -> vector<16x128xf32>
    %9 = arith.addf %0, %8 : vector<16x128xf32>
    %cst_10 = arith.constant 0.000000e+00 : bf16
    %10 = vector.broadcast %cst_10 : bf16 to vector<6x10xbf16>
    %11 = vector.extract_strided_slice %2 {offsets = [0, 0], sizes = [6, 118], strides = [1, 1]} : vector<6x128xbf16> to vector<6x118xbf16>
    %12 = tpu.concatenate %10, %11 in 1 : vector<6x10xbf16>, vector<6x118xbf16> -> vector<6x128xbf16>
    %c0_11 = arith.constant 0 : index
    %c0_12 = arith.constant 0 : index
    %c1 = arith.constant 1 : index
    %c0_13 = arith.constant 0 : index
    %c0_14 = arith.constant 0 : index
    %13 = vector.load %arg3[%c0_11, %c0_12, %c1, %c0_13, %c0_14] : memref<1x3x3x16x6xbf16, #tpu.memory_space<vmem>>, vector<1x1x1x16x6xbf16>
    %14 = vector.shape_cast %13 : vector<1x1x1x16x6xbf16> to vector<16x6xbf16>
    %cst_15 = arith.constant dense<0.000000e+00> : vector<16x128xf32>
    %15 = tpu.matmul %14, %12, %cst_15 {dimension_numbers = #tpu.dot_dimension_numbers<[1], [0], [0], [1], [0, 0, 1, 1], [], []>} : vector<16x6xbf16>, vector<6x128xbf16>, vector<16x128xf32> -> vector<16x128xf32>
    %16 = arith.addf %9, %15 : vector<16x128xf32>
    %cst_16 = arith.constant 0.000000e+00 : bf16
    %17 = vector.broadcast %cst_16 : bf16 to vector<6x9xbf16>
    %18 = vector.extract_strided_slice %2 {offsets = [0, 0], sizes = [6, 119], strides = [1, 1]} : vector<6x128xbf16> to vector<6x119xbf16>
    %19 = tpu.concatenate %17, %18 in 1 : vector<6x9xbf16>, vector<6x119xbf16> -> vector<6x128xbf16>
    %c0_17 = arith.constant 0 : index
    %c0_18 = arith.constant 0 : index
    %c2 = arith.constant 2 : index
    %c0_19 = arith.constant 0 : index
    %c0_20 = arith.constant 0 : index
    %20 = vector.load %arg3[%c0_17, %c0_18, %c2, %c0_19, %c0_20] : memref<1x3x3x16x6xbf16, #tpu.memory_space<vmem>>, vector<1x1x1x16x6xbf16>
    %21 = vector.shape_cast %20 : vector<1x1x1x16x6xbf16> to vector<16x6xbf16>
    %cst_21 = arith.constant dense<0.000000e+00> : vector<16x128xf32>
    %22 = tpu.matmul %21, %19, %cst_21 {dimension_numbers = #tpu.dot_dimension_numbers<[1], [0], [0], [1], [0, 0, 1, 1], [], []>} : vector<16x6xbf16>, vector<6x128xbf16>, vector<16x128xf32> -> vector<16x128xf32>
    %23 = arith.addf %16, %22 : vector<16x128xf32>
    %cst_22 = arith.constant 0.000000e+00 : bf16
    %24 = vector.broadcast %cst_22 : bf16 to vector<6x1xbf16>
    %25 = vector.extract_strided_slice %2 {offsets = [0, 0], sizes = [6, 127], strides = [1, 1]} : vector<6x128xbf16> to vector<6x127xbf16>
    %26 = tpu.concatenate %24, %25 in 1 : vector<6x1xbf16>, vector<6x127xbf16> -> vector<6x128xbf16>
    %c0_23 = arith.constant 0 : index
    %c1_24 = arith.constant 1 : index
    %c0_25 = arith.constant 0 : index
    %c0_26 = arith.constant 0 : index
    %c0_27 = arith.constant 0 : index
    %27 = vector.load %arg3[%c0_23, %c1_24, %c0_25, %c0_26, %c0_27] : memref<1x3x3x16x6xbf16, #tpu.memory_space<vmem>>, vector<1x1x1x16x6xbf16>
    %28 = vector.shape_cast %27 : vector<1x1x1x16x6xbf16> to vector<16x6xbf16>
    %cst_28 = arith.constant dense<0.000000e+00> : vector<16x128xf32>
    %29 = tpu.matmul %28, %26, %cst_28 {dimension_numbers = #tpu.dot_dimension_numbers<[1], [0], [0], [1], [0, 0, 1, 1], [], []>} : vector<16x6xbf16>, vector<6x128xbf16>, vector<16x128xf32> -> vector<16x128xf32>
    %30 = arith.addf %23, %29 : vector<16x128xf32>
    %c0_29 = arith.constant 0 : index
    %c1_30 = arith.constant 1 : index
    %c1_31 = arith.constant 1 : index
    %c0_32 = arith.constant 0 : index
    %c0_33 = arith.constant 0 : index
    %31 = vector.load %arg3[%c0_29, %c1_30, %c1_31, %c0_32, %c0_33] : memref<1x3x3x16x6xbf16, #tpu.memory_space<vmem>>, vector<1x1x1x16x6xbf16>
    %32 = vector.shape_cast %31 : vector<1x1x1x16x6xbf16> to vector<16x6xbf16>
    %cst_34 = arith.constant dense<0.000000e+00> : vector<16x128xf32>
    %33 = tpu.matmul %32, %2, %cst_34 {dimension_numbers = #tpu.dot_dimension_numbers<[1], [0], [0], [1], [0, 0, 1, 1], [], []>} : vector<16x6xbf16>, vector<6x128xbf16>, vector<16x128xf32> -> vector<16x128xf32>
    %34 = arith.addf %30, %33 : vector<16x128xf32>
    %cst_35 = arith.constant 0.000000e+00 : bf16
    %35 = vector.broadcast %cst_35 : bf16 to vector<6x1xbf16>
    %36 = vector.extract_strided_slice %2 {offsets = [0, 1], sizes = [6, 127], strides = [1, 1]} : vector<6x128xbf16> to vector<6x127xbf16>
    %37 = tpu.concatenate %36, %35 in 1 : vector<6x127xbf16>, vector<6x1xbf16> -> vector<6x128xbf16>
    %c0_36 = arith.constant 0 : index
    %c1_37 = arith.constant 1 : index
    %c2_38 = arith.constant 2 : index
    %c0_39 = arith.constant 0 : index
    %c0_40 = arith.constant 0 : index
    %38 = vector.load %arg3[%c0_36, %c1_37, %c2_38, %c0_39, %c0_40] : memref<1x3x3x16x6xbf16, #tpu.memory_space<vmem>>, vector<1x1x1x16x6xbf16>
    %39 = vector.shape_cast %38 : vector<1x1x1x16x6xbf16> to vector<16x6xbf16>
    %cst_41 = arith.constant dense<0.000000e+00> : vector<16x128xf32>
    %40 = tpu.matmul %39, %37, %cst_41 {dimension_numbers = #tpu.dot_dimension_numbers<[1], [0], [0], [1], [0, 0, 1, 1], [], []>} : vector<16x6xbf16>, vector<6x128xbf16>, vector<16x128xf32> -> vector<16x128xf32>
    %41 = arith.addf %34, %40 : vector<16x128xf32>
    %cst_42 = arith.constant 0.000000e+00 : bf16
    %42 = vector.broadcast %cst_42 : bf16 to vector<6x9xbf16>
    %43 = vector.extract_strided_slice %2 {offsets = [0, 9], sizes = [6, 119], strides = [1, 1]} : vector<6x128xbf16> to vector<6x119xbf16>
    %44 = tpu.concatenate %43, %42 in 1 : vector<6x119xbf16>, vector<6x9xbf16> -> vector<6x128xbf16>
    %c0_43 = arith.constant 0 : index
    %c2_44 = arith.constant 2 : index
    %c0_45 = arith.constant 0 : index
    %c0_46 = arith.constant 0 : index
    %c0_47 = arith.constant 0 : index
    %45 = vector.load %arg3[%c0_43, %c2_44, %c0_45, %c0_46, %c0_47] : memref<1x3x3x16x6xbf16, #tpu.memory_space<vmem>>, vector<1x1x1x16x6xbf16>
    %46 = vector.shape_cast %45 : vector<1x1x1x16x6xbf16> to vector<16x6xbf16>
    %cst_48 = arith.constant dense<0.000000e+00> : vector<16x128xf32>
    %47 = tpu.matmul %46, %44, %cst_48 {dimension_numbers = #tpu.dot_dimension_numbers<[1], [0], [0], [1], [0, 0, 1, 1], [], []>} : vector<16x6xbf16>, vector<6x128xbf16>, vector<16x128xf32> -> vector<16x128xf32>
    %48 = arith.addf %41, %47 : vector<16x128xf32>
    %cst_49 = arith.constant 0.000000e+00 : bf16
    %49 = vector.broadcast %cst_49 : bf16 to vector<6x10xbf16>
    %50 = vector.extract_strided_slice %2 {offsets = [0, 10], sizes = [6, 118], strides = [1, 1]} : vector<6x128xbf16> to vector<6x118xbf16>
    %51 = tpu.concatenate %50, %49 in 1 : vector<6x118xbf16>, vector<6x10xbf16> -> vector<6x128xbf16>
    %c0_50 = arith.constant 0 : index
    %c2_51 = arith.constant 2 : index
    %c1_52 = arith.constant 1 : index
    %c0_53 = arith.constant 0 : index
    %c0_54 = arith.constant 0 : index
    %52 = vector.load %arg3[%c0_50, %c2_51, %c1_52, %c0_53, %c0_54] : memref<1x3x3x16x6xbf16, #tpu.memory_space<vmem>>, vector<1x1x1x16x6xbf16>
    %53 = vector.shape_cast %52 : vector<1x1x1x16x6xbf16> to vector<16x6xbf16>
    %cst_55 = arith.constant dense<0.000000e+00> : vector<16x128xf32>
    %54 = tpu.matmul %53, %51, %cst_55 {dimension_numbers = #tpu.dot_dimension_numbers<[1], [0], [0], [1], [0, 0, 1, 1], [], []>} : vector<16x6xbf16>, vector<6x128xbf16>, vector<16x128xf32> -> vector<16x128xf32>
    %55 = arith.addf %48, %54 : vector<16x128xf32>
    %cst_56 = arith.constant 0.000000e+00 : bf16
    %56 = vector.broadcast %cst_56 : bf16 to vector<6x11xbf16>
    %57 = vector.extract_strided_slice %2 {offsets = [0, 11], sizes = [6, 117], strides = [1, 1]} : vector<6x128xbf16> to vector<6x117xbf16>
    %58 = tpu.concatenate %57, %56 in 1 : vector<6x117xbf16>, vector<6x11xbf16> -> vector<6x128xbf16>
    %c0_57 = arith.constant 0 : index
    %c2_58 = arith.constant 2 : index
    %c2_59 = arith.constant 2 : index
    %c0_60 = arith.constant 0 : index
    %c0_61 = arith.constant 0 : index
    %59 = vector.load %arg3[%c0_57, %c2_58, %c2_59, %c0_60, %c0_61] : memref<1x3x3x16x6xbf16, #tpu.memory_space<vmem>>, vector<1x1x1x16x6xbf16>
    %60 = vector.shape_cast %59 : vector<1x1x1x16x6xbf16> to vector<16x6xbf16>
    %cst_62 = arith.constant dense<0.000000e+00> : vector<16x128xf32>
    %61 = tpu.matmul %60, %58, %cst_62 {dimension_numbers = #tpu.dot_dimension_numbers<[1], [0], [0], [1], [0, 0, 1, 1], [], []>} : vector<16x6xbf16>, vector<6x128xbf16>, vector<16x128xf32> -> vector<16x128xf32>
    %62 = arith.addf %55, %61 : vector<16x128xf32>
    %c0_63 = arith.constant 0 : index
    %c0_64 = arith.constant 0 : index
    %c0_65 = arith.constant 0 : index
    %63 = vector.load %arg4[%c0_63, %c0_64, %c0_65] : memref<1x16x1xf32, #tpu.memory_space<vmem>>, vector<1x16x1xf32>
    %64 = vector.shape_cast %63 : vector<1x16x1xf32> to vector<16x1xf32>
    %65 = vector.broadcast %64 : vector<16x1xf32> to vector<16x128xf32>
    %66 = arith.addf %62, %65 : vector<16x128xf32>
    %cst_66 = arith.constant 0.000000e+00 : f32
    %67 = vector.broadcast %cst_66 : f32 to vector<16x128xf32>
    %68 = arith.cmpf oge, %66, %67 : vector<16x128xf32>
    %cst_67 = arith.constant 2.000000e-01 : f32
    %69 = vector.broadcast %cst_67 : f32 to vector<16x128xf32>
    %70 = arith.mulf %69, %66 : vector<16x128xf32>
    %71 = arith.select %68, %66, %70 : vector<16x128xi1>, vector<16x128xf32>
    %c0_68 = arith.constant 0 : index
    %c0_69 = arith.constant 0 : index
    %72 = vector.load %arg5[%c0_68, %c0_69] : memref<1x128xf32, #tpu.memory_space<vmem>>, vector<1x128xf32>
    %73 = vector.broadcast %72 : vector<1x128xf32> to vector<16x128xf32>
    %74 = arith.mulf %71, %73 : vector<16x128xf32>
    %75 = arith.truncf %74 : vector<16x128xf32> to vector<16x128xbf16>
    %c0_70 = arith.constant 0 : index
    %c0_71 = arith.constant 0 : index
    %c0_72 = arith.constant 0 : index
    %c0_73 = arith.constant 0 : index
    %76 = vector.load %arg6[%c0_70, %c0_71, %c0_72, %c0_73] : memref<1x1x16x128xbf16, #tpu.memory_space<vmem>>, vector<1x1x16x128xbf16>
    %77 = vector.shape_cast %76 : vector<1x1x16x128xbf16> to vector<16x128xbf16>
    %78 = vector.shape_cast %75 : vector<16x128xbf16> to vector<1x1x16x128xbf16>
    tpu.vector_store %arg6[%c0_70, %c0_71, %c0_72, %c0_73], %78 {strides = array<i32>} : memref<1x1x16x128xbf16, #tpu.memory_space<vmem>>, vector<1x1x16x128xbf16>,
    return
  }
  func.func @transform_0(%arg0: i32, %arg1: i32) -> (i32, i32, i32, i32) {
    %c0_i32 = arith.constant 0 : i32
    %c0_i32_0 = arith.constant 0 : i32
    %c0_i32_1 = arith.constant 0 : i32
    return %arg0, %arg1, %c0_i32, %c0_i32_0 : i32, i32, i32, i32
  }
  func.func @transform_1(%arg0: i32, %arg1: i32) -> (i32, i32, i32, i32, i32) {
    %c0_i32 = arith.constant 0 : i32
    %c0_i32_0 = arith.constant 0 : i32
    %c0_i32_1 = arith.constant 0 : i32
    %c0_i32_2 = arith.constant 0 : i32
    %c0_i32_3 = arith.constant 0 : i32
    return %arg0, %c0_i32, %c0_i32_0, %c0_i32_1, %c0_i32_2 : i32, i32, i32, i32, i32
  }
  func.func @transform_2(%arg0: i32, %arg1: i32) -> (i32, i32, i32) {
    %c0_i32 = arith.constant 0 : i32
    %c0_i32_0 = arith.constant 0 : i32
    %c0_i32_1 = arith.constant 0 : i32
    return %arg0, %c0_i32, %c0_i32_0 : i32, i32, i32
  }
  func.func @transform_3(%arg0: i32, %arg1: i32) -> (i32, i32) {
    %c0_i32 = arith.constant 0 : i32
    %c0_i32_0 = arith.constant 0 : i32
    %c0_i32_1 = arith.constant 0 : i32
    return %c0_i32, %c0_i32_0 : i32, i32
  }
  func.func @transform_4(%arg0: i32, %arg1: i32) -> (i32, i32, i32, i32) {
    %c0_i32 = arith.constant 0 : i32
    %c0_i32_0 = arith.constant 0 : i32
    %c0_i32_1 = arith.constant 0 : i32
    return %arg0, %arg1, %c0_i32, %c0_i32_0 : i32, i32, i32, i32
  }
}

</mosaic_0001>

<llo_original>
// kernel: tpu_custom_call.1
$region0: #{tpu_custom_call.1}
  #allocation0 [shape = 'u32[]', space=smem, size = 0x4, offset = 0x4, fixed_abs, tag = 'smem constant byte address 0x4 - core index']
  #allocation1 [shape = 'u32[144,128]{1,0:T(1,128)}', space=vmem, size = 0x12000, scoped, tag = 'internal scratch']
  %s0 = inlined_call_operand.vmem [shape: bf16[2,2,6,128], index: 0, kind: input, shape index: {}]
  %s1 = inlined_call_operand.vmem [shape: bf16[2,3,3,16,6], index: 1, kind: input, shape index: {}]
  %s2 = inlined_call_operand.vmem [shape: f32[2,16,1], index: 2, kind: input, shape index: {}]
  %s3 = inlined_call_operand.vmem [shape: f32[1,128], index: 3, kind: input, shape index: {}]
  %s4 = inlined_call_operand.hbm [shape: bf16[2,2,16,128], index: 4, kind: output, shape index: {}]
  %s5 = sld [smem:[#allocation0]]
  $region49: #{tpu_custom_call.1} parent=0
    _
  %s7 = ssub.s32 1, %s5
  %s8 = scalar_select 0, %s7, %s5
  $region1: #{tpu_custom_call.1} parent=0
    #allocation2 [shape = 'u8[8192]{0}', space=vmem, size = 0x2000, scoped, tag = 'output window, operand 0']
    #allocation3 [shape = 's32[2]{0}', space=sflag, size = 0x8, scoped, tag = 'scoped memory for tpu_custom_call.1']
    %9 = vsyncpa [#allocation3], 0
    %s10 = scalar_lea.sflag [#allocation3], 1
    %11 = vsyncpa %s10, 0
    loop: start=0, step=1, limit=6
    $region2: #{tpu_custom_call.1} parent=1 // loop_pre_header
      _
    $region3: #{tpu_custom_call.1} parent=1 // loop_header
      %s13 = sphi 0, %s17
      %p14 = scmp.ge.s32.totalorder %s13, 6
      %s20 = sphi 0, %s32
      %s21 = sphi 0, %s28
      %s22 = sphi 0, %s20
      %s23 = sphi 0, %s21
      %s24 = sphi 0, %s22
      %s25 = sphi 0, %s23
      %s37 = sphi 0, %s39
      %s40 = sphi 0, %s37
      %s41 = sphi 0, %s40
      %s57 = sphi 0, %s41
      %s63 = sphi 0, %s65
      %s66 = sphi 0, %s63
      %s67 = sphi 0, %s66
      %s83 = sphi 0, %s67
      %s89 = sphi 0, %s91
      %s92 = sphi 0, %s89
      %s93 = sphi 0, %s92
      %s109 = sphi 0, %s93
      %s113 = sphi 0, %s113
      %s115 = sphi 0, %s113
      %s116 = sphi 0, %s115
      %s130 = sphi 0, %s116
      %s138 = sphi 0, %s140
      %s141 = sphi 0, %s138
      %s142 = sphi 0, %s141
      %s158 = sphi 0, %s142
    $region4: #{tpu_custom_call.1} parent=1 // loop_header_branch
      %16 = sbr.rel (%p14) target = $region8
    $region5: #{tpu_custom_call.1} parent=1 // loop_body
      %s18 = ssub.s32 %s13, 1
      %s19 = ssub.s32 %s13, 2
      %s26 = sadd.s32 1, %s21
      %p27 = scmp.ge.s32.totalorder %s26, 2
      %s28 = scalar_select %p27, 0, %s26
      %s29 = sadd.s32 1, %s20
      %s30 = scalar_select %p27, %s29, %s20
      %p31 = scmp.ge.s32.totalorder %s30, 2
      %s32 = scalar_select %p31, 0, %s30
      %s33 = ssub.s32 %s20, %s32
      %s34 = ssub.s32 %s21, %s28
      %s35 = sor.u32 %s33, %s34
      %p36 = scmp.eq.s32.totalorder %s35, 0
      %s38 = sadd.s32 %s37, 1
      %s39 = scalar_select %p36, %s37, %s38
      %p42 = pneg %p36
      %p43 = scmp.eq.s32.totalorder %s13, 3
      %p44 = por %p42, %p43
      %p45 = scmp.ne.s32.totalorder %s37, %s40
      %p46 = scmp.eq.s32.totalorder %s13, 0
      %p47 = por %p45, %p46
      %p48 = scmp.ne.s32.totalorder %s37, %s40
      %p49 = scmp.eq.s32.totalorder %s18, 3
      %p50 = por %p48, %p49
      %p51 = scmp.ne.s32.totalorder %s40, %s41
      %p52 = scmp.eq.s32.totalorder %s18, 0
      %p53 = por %p51, %p52
      %p54 = scmp.ne.s32.totalorder %s40, %s41
      %p55 = scmp.eq.s32.totalorder %s19, 3
      %p56 = por %p54, %p55
      %p58 = scmp.ne.s32.totalorder %s41, %s57
      %p59 = scmp.eq.s32.totalorder %s19, 0
      %p60 = por %p58, %p59
      %s61 = ssub.s32 %s20, %s32
      %p62 = scmp.eq.s32.totalorder %s61, 0
      %s64 = sadd.s32 %s63, 1
      %s65 = scalar_select %p62, %s63, %s64
      %p68 = pneg %p62
      %p69 = scmp.eq.s32.totalorder %s13, 3
      %p70 = por %p68, %p69
      %p71 = scmp.ne.s32.totalorder %s63, %s66
      %p72 = scmp.eq.s32.totalorder %s13, 0
      %p73 = por %p71, %p72
      %p74 = scmp.ne.s32.totalorder %s63, %s66
      %p75 = scmp.eq.s32.totalorder %s18, 3
      %p76 = por %p74, %p75
      %p77 = scmp.ne.s32.totalorder %s66, %s67
      %p78 = scmp.eq.s32.totalorder %s18, 0
      %p79 = por %p77, %p78
      %p80 = scmp.ne.s32.totalorder %s66, %s67
      %p81 = scmp.eq.s32.totalorder %s19, 3
      %p82 = por %p80, %p81
      %p84 = scmp.ne.s32.totalorder %s67, %s83
      %p85 = scmp.eq.s32.totalorder %s19, 0
      %p86 = por %p84, %p85
      %s87 = ssub.s32 %s20, %s32
      %p88 = scmp.eq.s32.totalorder %s87, 0
      %s90 = sadd.s32 %s89, 1
      %s91 = scalar_select %p88, %s89, %s90
      %p94 = pneg %p88
      %p95 = scmp.eq.s32.totalorder %s13, 3
      %p96 = por %p94, %p95
      %p97 = scmp.ne.s32.totalorder %s89, %s92
      %p98 = scmp.eq.s32.totalorder %s13, 0
      %p99 = por %p97, %p98
      %p100 = scmp.ne.s32.totalorder %s89, %s92
      %p101 = scmp.eq.s32.totalorder %s18, 3
      %p102 = por %p100, %p101
      %p103 = scmp.ne.s32.totalorder %s92, %s93
      %p104 = scmp.eq.s32.totalorder %s18, 0
      %p105 = por %p103, %p104
      %p106 = scmp.ne.s32.totalorder %s92, %s93
      %p107 = scmp.eq.s32.totalorder %s19, 3
      %p108 = por %p106, %p107
      %p110 = scmp.ne.s32.totalorder %s93, %s109
      %p111 = scmp.eq.s32.totalorder %s19, 0
      %p112 = por %p110, %p111
      %s114 = sadd.s32 %s113, 1
      %p117 = scmp.eq.s32.totalorder %s13, 3
      %p118 = scmp.ne.s32.totalorder %s113, %s115
      %p119 = scmp.eq.s32.totalorder %s13, 0
      %p120 = por %p118, %p119
      %p121 = scmp.ne.s32.totalorder %s113, %s115
      %p122 = scmp.eq.s32.totalorder %s18, 3
      %p123 = por %p121, %p122
      %p124 = scmp.ne.s32.totalorder %s115, %s116
      %p125 = scmp.eq.s32.totalorder %s18, 0
      %p126 = por %p124, %p125
      %p127 = scmp.ne.s32.totalorder %s115, %s116
      %p128 = scmp.eq.s32.totalorder %s19, 3
      %p129 = por %p127, %p128
      %p131 = scmp.ne.s32.totalorder %s116, %s130
      %p132 = scmp.eq.s32.totalorder %s19, 0
      %p133 = por %p131, %p132
      %s134 = ssub.s32 %s20, %s32
      %s135 = ssub.s32 %s21, %s28
      %s136 = sor.u32 %s134, %s135
      %p137 = scmp.eq.s32.totalorder %s136, 0
      %s139 = sadd.s32 %s138, 1
      %s140 = scalar_select %p137, %s138, %s139
      %p143 = pneg %p137
      %p144 = scmp.eq.s32.totalorder %s13, 3
      %p145 = por %p143, %p144
      %p146 = scmp.ne.s32.totalorder %s138, %s141
      %p147 = scmp.eq.s32.totalorder %s13, 0
      %p148 = por %p146, %p147
      %p149 = scmp.ne.s32.totalorder %s138, %s141
      %p150 = scmp.eq.s32.totalorder %s18, 3
      %p151 = por %p149, %p150
      %p152 = scmp.ne.s32.totalorder %s141, %s142
      %p153 = scmp.eq.s32.totalorder %s18, 0
      %p154 = por %p152, %p153
      %p155 = scmp.ne.s32.totalorder %s141, %s142
      %p156 = scmp.eq.s32.totalorder %s19, 3
      %p157 = por %p155, %p156
      %p159 = scmp.ne.s32.totalorder %s142, %s158
      %p160 = scmp.eq.s32.totalorder %s19, 0
      %p161 = por %p159, %p160
      %p162 = scmp.le.s32.totalorder 1, %s13
      %p163 = scmp.lt.s32.totalorder %s13, 5
      %p164 = pnand %p162, %p163
      %p165 = pneg %p164
      // Predicated region
      $region9: #{tpu_custom_call.1} parent=5 // pred_check
        _
      $region10: #{tpu_custom_call.1} parent=5 // pred_check_branch
        %167 = sbr.rel (%p164) target = $region12
      $region11: #{tpu_custom_call.1} parent=5 // pred_region
        %s168 = ssub.s32 %s13, 1
        // Predicated region
        $region13: #{tpu_custom_call.1} parent=11 // pred_check
          %p169 = pneg %p126
        $region14: #{tpu_custom_call.1} parent=11 // pred_check_branch
          %171 = sbr.rel (%p169) target = $region16
        $region15: #{tpu_custom_call.1} parent=11 // pred_region
          _
        $region16: #{tpu_custom_call.1} parent=11 // pred_fallthru
          _
      $region12: #{tpu_custom_call.1} parent=5 // pred_fallthru
        _
      %p172 = scmp.lt.s32.totalorder %s13, 4
      // Predicated region
      $region17: #{tpu_custom_call.1} parent=5 // pred_check
        %p173 = pneg %p172
      $region18: #{tpu_custom_call.1} parent=5 // pred_check_branch
        %175 = sbr.rel (%p173) target = $region20
      $region19: #{tpu_custom_call.1} parent=5 // pred_region
        // Predicated region
        $region21: #{tpu_custom_call.1} parent=19 // pred_check
          %p176 = pneg %p47
        $region22: #{tpu_custom_call.1} parent=19 // pred_check_branch
          %178 = sbr.rel (%p176) target = $region24
        $region23: #{tpu_custom_call.1} parent=19 // pred_region
          %p179 = scmp.lt.s32.totalorder %s20, 1
          %s180 = scalar_select %p179, %s20, 1
          %p181 = scmp.lt.s32.totalorder %s21, 1
          %s182 = scalar_select %p181, %s21, 1
          %s183 = smul.addr %s180, 2
          %s184 = sadd.s32 %s182, %s183
          %s185 = smul.addr %s184, 4
          %s186 = scalar_lea.vmem %s0, %s185
        $region24: #{tpu_custom_call.1} parent=19 // pred_fallthru
          _
        // Predicated region
        $region25: #{tpu_custom_call.1} parent=19 // pred_check
          %p187 = pneg %p73
        $region26: #{tpu_custom_call.1} parent=19 // pred_check_branch
          %189 = sbr.rel (%p187) target = $region28
        $region27: #{tpu_custom_call.1} parent=19 // pred_region
          %p190 = scmp.lt.s32.totalorder %s20, 1
          %s191 = scalar_select %p190, %s20, 1
          %s192 = smul.addr %s191, 18
          %s193 = smul.addr %s192, 4
          %s194 = scalar_lea.vmem %s1, %s193
        $region28: #{tpu_custom_call.1} parent=19 // pred_fallthru
          _
        // Predicated region
        $region29: #{tpu_custom_call.1} parent=19 // pred_check
          %p195 = pneg %p99
        $region30: #{tpu_custom_call.1} parent=19 // pred_check_branch
          %197 = sbr.rel (%p195) target = $region32
        $region31: #{tpu_custom_call.1} parent=19 // pred_region
          %p198 = scmp.lt.s32.totalorder %s20, 1
          %s199 = scalar_select %p198, %s20, 1
          %s200 = smul.addr %s199, 2
          %s201 = smul.addr %s200, 8
          %s202 = scalar_lea.vmem %s2, %s201
        $region32: #{tpu_custom_call.1} parent=19 // pred_fallthru
          _
      $region20: #{tpu_custom_call.1} parent=5 // pred_fallthru
        _
      %p203 = scmp.le.s32.totalorder 1, %s13
      %p204 = scmp.lt.s32.totalorder %s13, 5
      %p205 = pnand %p203, %p204
      %p206 = pneg %p205
      // Predicated region
      $region33: #{tpu_custom_call.1} parent=5 // pred_check
        _
      $region34: #{tpu_custom_call.1} parent=5 // pred_check_branch
        %208 = sbr.rel (%p205) target = $region36
      $region35: #{tpu_custom_call.1} parent=5 // pred_region
        %s209 = ssub.s32 %s13, 1
        %p210 = scmp.lt.s32.totalorder %s22, 1
        %s211 = scalar_select %p210, %s22, 1
        %p212 = scmp.lt.s32.totalorder %s23, 1
        %s213 = scalar_select %p212, %s23, 1
        %s214 = smul.addr %s211, 2
        %s215 = sadd.s32 %s213, %s214
        %s216 = smul.addr %s215, 4
        %s217 = scalar_lea.vmem %s0, %s216
        %p218 = pneg %p53
        %p219 = pneg %p50
        %p220 = scmp.lt.s32.totalorder %s22, 1
        %s221 = scalar_select %p220, %s22, 1
        %s222 = smul.addr %s221, 18
        %s223 = smul.addr %s222, 4
        %s224 = scalar_lea.vmem %s1, %s223
        %p225 = pneg %p79
        %p226 = pneg %p76
        %p227 = scmp.lt.s32.totalorder %s22, 1
        %s228 = scalar_select %p227, %s22, 1
        %s229 = smul.addr %s228, 2
        %s230 = smul.addr %s229, 8
        %s231 = scalar_lea.vmem %s2, %s230
        %p232 = pneg %p105
        %p233 = pneg %p102
        %p234 = pneg %p126
        %p235 = pneg %p123
        %p236 = pneg %p154
        %p237 = pneg %p151
        %s238 = sand.u32 %s141, 1
        %s239 = scalar_lea.sflag [#allocation3], %s238
        %s240 = sand.u32 %s141, 1
        %s241 = smul.addr %s240, 8
        %s242 = scalar_lea.vmem [#allocation2], %s241
        %p243 = scmp.lt.s32.totalorder %s22, 1
        %s244 = scalar_select %p243, %s22, 1
        %p245 = scmp.lt.s32.totalorder %s23, 1
        %s246 = scalar_select %p245, %s23, 1
        %s247 = smul.addr %s244, 2
        %s248 = sadd.s32 %s246, %s247
        %s249 = smul.addr %s248, 4
        %s250 = scalar_lea.vmem %s0, %s249
        %p251 = scmp.lt.s32.totalorder %s22, 1
        %s252 = scalar_select %p251, %s22, 1
        %s253 = smul.addr %s252, 18
        %s254 = smul.addr %s253, 4
        %s255 = scalar_lea.vmem %s1, %s254
        %p256 = scmp.lt.s32.totalorder %s22, 1
        %s257 = scalar_select %p256, %s22, 1
        %s258 = smul.addr %s257, 2
        %s259 = smul.addr %s258, 8
        %s260 = scalar_lea.vmem %s2, %s259
        %v262 = vld [vmem:[%s250] sm:$0x7]
        %v264 = vunpack.c.l.b16 %v262
        %v265 = vpack.c.b16 %v264, %v264
        %266 = vrot.lane.b32.xlu0 %v265, 11
        %v267 = vpop.permute.xlu0 %266
        %vm268 = vcmask 89088
        %v271 = vsel %vm268, 0, %v267
        %v272 = vld [vmem:[%s255] sm:$0xf]
        %v273 = vld [vmem:[%s255 + $0x4] sm:$0xf]
        %274 = vrot.lane.b32.xlu0 %v265, 10
        %v275 = vpop.permute.xlu0 %274
        %vm276 = vcmask 80896
        %v278 = vsel %vm276, 0, %v275
        %s279 = scalar_lea.vmem %s255, 8
        %v280 = vld [vmem:[%s279] sm:$0xf]
        %v281 = vld [vmem:[%s279 + $0x4] sm:$0xf]
        %v284 = vunpack.c.l.b16 %v280
        %v285 = vunpack.c.l.b16 %v281
        %v286 = vpack.c.b16 %v285, %v284
        %vm287 = vcmask 48128
        %v289 = vsel %vm287, %v286, 0
        %vm291 = vcmask 1042432
        %v292 = vsel %vm291, %v278, 0
        %294 = vmatprep.subr.bf16.mxu0 0
        %295 = vmatpush1.bf16.msra.mxu0 0
        %296 = vmatprep.subr.bf16.mxu0 0
        %297 = vmatpush1.bf16.msra.mxu0 0
        %298 = vmatprep.subr.bf16.mxu0 0
        %299 = vmatpush1.bf16.msra.mxu0 0
        %300 = vmatprep.subr.bf16.mxu0 0
        %301 = vmatpush1.bf16.msra.mxu0 0
        %302 = vmatprep.subr.bf16.mxu0 0
        %303 = vmatpush1.bf16.msra.mxu0 0
        %304 = vmatprep.subr.bf16.mxu0 0
        %305 = vmatpush1.bf16.msra.mxu0 0
        %306 = vmatprep.subr.bf16.mxu0 0
        %307 = vmatpush1.bf16.msra.mxu0 0
        %308 = vmatprep.subr.bf16.mxu0 0
        %309 = vmatpush1.bf16.msra.mxu0 %v292
        %310 = vmatprep.subr.bf16.mxu0 0
        %311 = vmatpush2.bf16.msra.mxu0 0
        %312 = vmatprep.subr.bf16.mxu0 0
        %313 = vmatpush2.bf16.msra.mxu0 0
        %314 = vmatprep.subr.bf16.mxu0 0
        %315 = vmatpush2.bf16.msra.mxu0 0
        %316 = vmatprep.subr.bf16.mxu0 0
        %317 = vmatpush2.bf16.msra.mxu0 0
        %318 = vmatprep.subr.bf16.mxu0 0
        %319 = vmatpush2.bf16.msra.mxu0 0
        %320 = vmatprep.subr.bf16.mxu0 0
        %321 = vmatpush2.bf16.msra.mxu0 0
        %322 = vmatprep.subr.bf16.mxu0 0
        %323 = vmatpush2.bf16.msra.mxu0 0
        %324 = vmatprep.subr.bf16.mxu0 0
        %325 = vmatpush2.bf16.msra.mxu0 0
        %326 = vmatprep.mubr.bf16.mxu0 0
        %327 = vmatmul.mubr.bf16.gmra.mxu0 %v289
        %v328 = vpop.f32.mrf.mxu0
        %v329 = vadd.f32 0.0, %v328
        %v330 = vpop.f32.mrf.mxu0
        %v331 = vpop.f32.mrf.mxu0
        %v332 = vadd.f32 0.0, %v331
        %v333 = vpop.f32.mrf.mxu0
        %334 = vdwg.mxu0
        %v337 = vunpack.c.l.b16 %v272
        %v338 = vunpack.c.l.b16 %v273
        %v339 = vpack.c.b16 %v338, %v337
        %v341 = vsel %vm287, %v339, 0
        %v343 = vsel %vm291, %v271, 0
        %345 = vmatprep.subr.bf16.mxu0 0
        %346 = vmatpush1.bf16.msra.mxu0 0
        %347 = vmatprep.subr.bf16.mxu0 0
        %348 = vmatpush1.bf16.msra.mxu0 0
        %349 = vmatprep.subr.bf16.mxu0 0
        %350 = vmatpush1.bf16.msra.mxu0 0
        %351 = vmatprep.subr.bf16.mxu0 0
        %352 = vmatpush1.bf16.msra.mxu0 0
        %353 = vmatprep.subr.bf16.mxu0 0
        %354 = vmatpush1.bf16.msra.mxu0 0
        %355 = vmatprep.subr.bf16.mxu0 0
        %356 = vmatpush1.bf16.msra.mxu0 0
        %357 = vmatprep.subr.bf16.mxu0 0
        %358 = vmatpush1.bf16.msra.mxu0 0
        %359 = vmatprep.subr.bf16.mxu0 0
        %360 = vmatpush1.bf16.msra.mxu0 %v343
        %361 = vmatprep.subr.bf16.mxu0 0
        %362 = vmatpush2.bf16.msra.mxu0 0
        %363 = vmatprep.subr.bf16.mxu0 0
        %364 = vmatpush2.bf16.msra.mxu0 0
        %365 = vmatprep.subr.bf16.mxu0 0
        %366 = vmatpush2.bf16.msra.mxu0 0
        %367 = vmatprep.subr.bf16.mxu0 0
        %368 = vmatpush2.bf16.msra.mxu0 0
        %369 = vmatprep.subr.bf16.mxu0 0
        %370 = vmatpush2.bf16.msra.mxu0 0
        %371 = vmatprep.subr.bf16.mxu0 0
        %372 = vmatpush2.bf16.msra.mxu0 0
        %373 = vmatprep.subr.bf16.mxu0 0
        %374 = vmatpush2.bf16.msra.mxu0 0
        %375 = vmatprep.subr.bf16.mxu0 0
        %376 = vmatpush2.bf16.msra.mxu0 0
        %377 = vmatprep.mubr.bf16.mxu0 0
        %378 = vmatmul.mubr.bf16.gmra.mxu0 %v341
        %v379 = vpop.f32.mrf.mxu0
        %v380 = vadd.f32 %v329, %v379
        %v381 = vpop.f32.mrf.mxu0
        %v382 = vpop.f32.mrf.mxu0
        %v383 = vadd.f32 %v332, %v382
        %v384 = vpop.f32.mrf.mxu0
        %385 = vdwg.mxu0
        %386 = vrot.lane.b32.xlu0 %v265, 9
        %v387 = vpop.permute.xlu0 %386
        %vm388 = vcmask 72704
        %v390 = vsel %vm388, 0, %v387
        %s391 = scalar_lea.vmem %s255, 16
        %v392 = vld [vmem:[%s391] sm:$0xf]
        %v393 = vld [vmem:[%s391 + $0x4] sm:$0xf]
        %v396 = vunpack.c.l.b16 %v392
        %v397 = vunpack.c.l.b16 %v393
        %v398 = vpack.c.b16 %v397, %v396
        %v400 = vsel %vm287, %v398, 0
        %v402 = vsel %vm291, %v390, 0
        %404 = vmatprep.subr.bf16.mxu0 0
        %405 = vmatpush1.bf16.msra.mxu0 0
        %406 = vmatprep.subr.bf16.mxu0 0
        %407 = vmatpush1.bf16.msra.mxu0 0
        %408 = vmatprep.subr.bf16.mxu0 0
        %409 = vmatpush1.bf16.msra.mxu0 0
        %410 = vmatprep.subr.bf16.mxu0 0
        %411 = vmatpush1.bf16.msra.mxu0 0
        %412 = vmatprep.subr.bf16.mxu0 0
        %413 = vmatpush1.bf16.msra.mxu0 0
        %414 = vmatprep.subr.bf16.mxu0 0
        %415 = vmatpush1.bf16.msra.mxu0 0
        %416 = vmatprep.subr.bf16.mxu0 0
        %417 = vmatpush1.bf16.msra.mxu0 0
        %418 = vmatprep.subr.bf16.mxu0 0
        %419 = vmatpush1.bf16.msra.mxu0 %v402
        %420 = vmatprep.subr.bf16.mxu0 0
        %421 = vmatpush2.bf16.msra.mxu0 0
        %422 = vmatprep.subr.bf16.mxu0 0
        %423 = vmatpush2.bf16.msra.mxu0 0
        %424 = vmatprep.subr.bf16.mxu0 0
        %425 = vmatpush2.bf16.msra.mxu0 0
        %426 = vmatprep.subr.bf16.mxu0 0
        %427 = vmatpush2.bf16.msra.mxu0 0
        %428 = vmatprep.subr.bf16.mxu0 0
        %429 = vmatpush2.bf16.msra.mxu0 0
        %430 = vmatprep.subr.bf16.mxu0 0
        %431 = vmatpush2.bf16.msra.mxu0 0
        %432 = vmatprep.subr.bf16.mxu0 0
        %433 = vmatpush2.bf16.msra.mxu0 0
        %434 = vmatprep.subr.bf16.mxu0 0
        %435 = vmatpush2.bf16.msra.mxu0 0
        %436 = vmatprep.mubr.bf16.mxu0 0
        %437 = vmatmul.mubr.bf16.gmra.mxu0 %v400
        %v438 = vpop.f32.mrf.mxu0
        %v439 = vadd.f32 0.0, %v438
        %v440 = vpop.f32.mrf.mxu0
        %v441 = vpop.f32.mrf.mxu0
        %v442 = vadd.f32 0.0, %v441
        %v443 = vpop.f32.mrf.mxu0
        %444 = vdwg.mxu0
        %v445 = vadd.f32 %v380, %v439
        %v446 = vadd.f32 %v383, %v442
        %447 = vrot.lane.b32.xlu0 %v265, 1
        %v448 = vpop.permute.xlu0 %447
        %vm449 = vcmask 7168
        %v451 = vsel %vm449, 0, %v448
        %s452 = scalar_lea.vmem %s255, 24
        %v453 = vld [vmem:[%s452] sm:$0xf]
        %v454 = vld [vmem:[%s452 + $0x4] sm:$0xf]
        %v457 = vunpack.c.l.b16 %v453
        %v458 = vunpack.c.l.b16 %v454
        %v459 = vpack.c.b16 %v458, %v457
        %v461 = vsel %vm287, %v459, 0
        %v463 = vsel %vm291, %v451, 0
        %465 = vmatprep.subr.bf16.mxu0 0
        %466 = vmatpush1.bf16.msra.mxu0 0
        %467 = vmatprep.subr.bf16.mxu0 0
        %468 = vmatpush1.bf16.msra.mxu0 0
        %469 = vmatprep.subr.bf16.mxu0 0
        %470 = vmatpush1.bf16.msra.mxu0 0
        %471 = vmatprep.subr.bf16.mxu0 0
        %472 = vmatpush1.bf16.msra.mxu0 0
        %473 = vmatprep.subr.bf16.mxu0 0
        %474 = vmatpush1.bf16.msra.mxu0 0
        %475 = vmatprep.subr.bf16.mxu0 0
        %476 = vmatpush1.bf16.msra.mxu0 0
        %477 = vmatprep.subr.bf16.mxu0 0
        %478 = vmatpush1.bf16.msra.mxu0 0
        %479 = vmatprep.subr.bf16.mxu0 0
        %480 = vmatpush1.bf16.msra.mxu0 %v463
        %481 = vmatprep.subr.bf16.mxu0 0
        %482 = vmatpush2.bf16.msra.mxu0 0
        %483 = vmatprep.subr.bf16.mxu0 0
        %484 = vmatpush2.bf16.msra.mxu0 0
        %485 = vmatprep.subr.bf16.mxu0 0
        %486 = vmatpush2.bf16.msra.mxu0 0
        %487 = vmatprep.subr.bf16.mxu0 0
        %488 = vmatpush2.bf16.msra.mxu0 0
        %489 = vmatprep.subr.bf16.mxu0 0
        %490 = vmatpush2.bf16.msra.mxu0 0
        %491 = vmatprep.subr.bf16.mxu0 0
        %492 = vmatpush2.bf16.msra.mxu0 0
        %493 = vmatprep.subr.bf16.mxu0 0
        %494 = vmatpush2.bf16.msra.mxu0 0
        %495 = vmatprep.subr.bf16.mxu0 0
        %496 = vmatpush2.bf16.msra.mxu0 0
        %497 = vmatprep.mubr.bf16.mxu0 0
        %498 = vmatmul.mubr.bf16.gmra.mxu0 %v461
        %v499 = vpop.f32.mrf.mxu0
        %v500 = vadd.f32 0.0, %v499
        %v501 = vpop.f32.mrf.mxu0
        %v502 = vpop.f32.mrf.mxu0
        %v503 = vadd.f32 0.0, %v502
        %v504 = vpop.f32.mrf.mxu0
        %505 = vdwg.mxu0
        %v506 = vadd.f32 %v445, %v500
        %v507 = vadd.f32 %v446, %v503
        %s508 = scalar_lea.vmem %s255, 32
        %v509 = vld [vmem:[%s508] sm:$0xf]
        %v510 = vld [vmem:[%s508 + $0x4] sm:$0xf]
        %v513 = vunpack.c.l.b16 %v509
        %v514 = vunpack.c.l.b16 %v510
        %v515 = vpack.c.b16 %v514, %v513
        %v517 = vsel %vm287, %v515, 0
        %v520 = vsel %vm291, %v262, 0
        %522 = vmatprep.subr.bf16.mxu0 0
        %523 = vmatpush1.bf16.msra.mxu0 0
        %524 = vmatprep.subr.bf16.mxu0 0
        %525 = vmatpush1.bf16.msra.mxu0 0
        %526 = vmatprep.subr.bf16.mxu0 0
        %527 = vmatpush1.bf16.msra.mxu0 0
        %528 = vmatprep.subr.bf16.mxu0 0
        %529 = vmatpush1.bf16.msra.mxu0 0
        %530 = vmatprep.subr.bf16.mxu0 0
        %531 = vmatpush1.bf16.msra.mxu0 0
        %532 = vmatprep.subr.bf16.mxu0 0
        %533 = vmatpush1.bf16.msra.mxu0 0
        %534 = vmatprep.subr.bf16.mxu0 0
        %535 = vmatpush1.bf16.msra.mxu0 0
        %536 = vmatprep.subr.bf16.mxu0 0
        %537 = vmatpush1.bf16.msra.mxu0 %v520
        %538 = vmatprep.subr.bf16.mxu0 0
        %539 = vmatpush2.bf16.msra.mxu0 0
        %540 = vmatprep.subr.bf16.mxu0 0
        %541 = vmatpush2.bf16.msra.mxu0 0
        %542 = vmatprep.subr.bf16.mxu0 0
        %543 = vmatpush2.bf16.msra.mxu0 0
        %544 = vmatprep.subr.bf16.mxu0 0
        %545 = vmatpush2.bf16.msra.mxu0 0
        %546 = vmatprep.subr.bf16.mxu0 0
        %547 = vmatpush2.bf16.msra.mxu0 0
        %548 = vmatprep.subr.bf16.mxu0 0
        %549 = vmatpush2.bf16.msra.mxu0 0
        %550 = vmatprep.subr.bf16.mxu0 0
        %551 = vmatpush2.bf16.msra.mxu0 0
        %552 = vmatprep.subr.bf16.mxu0 0
        %553 = vmatpush2.bf16.msra.mxu0 0
        %554 = vmatprep.mubr.bf16.mxu0 0
        %555 = vmatmul.mubr.bf16.gmra.mxu0 %v517
        %v556 = vpop.f32.mrf.mxu0
        %v557 = vadd.f32 0.0, %v556
        %v558 = vpop.f32.mrf.mxu0
        %v559 = vpop.f32.mrf.mxu0
        %v560 = vadd.f32 0.0, %v559
        %v561 = vpop.f32.mrf.mxu0
        %562 = vdwg.mxu0
        %v563 = vadd.f32 %v506, %v557
        %v564 = vadd.f32 %v507, %v560
        %565 = vrot.lane.b32.xlu0 %v265, 127
        %v566 = vpop.permute.xlu0 %565
        %vm567 = vcmask 1039360
        %v569 = vsel %vm567, %v566, 0
        %s570 = scalar_lea.vmem %s255, 40
        %v571 = vld [vmem:[%s570] sm:$0xf]
        %v572 = vld [vmem:[%s570 + $0x4] sm:$0xf]
        %v575 = vunpack.c.l.b16 %v571
        %v576 = vunpack.c.l.b16 %v572
        %v577 = vpack.c.b16 %v576, %v575
        %v579 = vsel %vm287, %v577, 0
        %v581 = vsel %vm291, %v569, 0
        %583 = vmatprep.subr.bf16.mxu0 0
        %584 = vmatpush1.bf16.msra.mxu0 0
        %585 = vmatprep.subr.bf16.mxu0 0
        %586 = vmatpush1.bf16.msra.mxu0 0
        %587 = vmatprep.subr.bf16.mxu0 0
        %588 = vmatpush1.bf16.msra.mxu0 0
        %589 = vmatprep.subr.bf16.mxu0 0
        %590 = vmatpush1.bf16.msra.mxu0 0
        %591 = vmatprep.subr.bf16.mxu0 0
        %592 = vmatpush1.bf16.msra.mxu0 0
        %593 = vmatprep.subr.bf16.mxu0 0
        %594 = vmatpush1.bf16.msra.mxu0 0
        %595 = vmatprep.subr.bf16.mxu0 0
        %596 = vmatpush1.bf16.msra.mxu0 0
        %597 = vmatprep.subr.bf16.mxu0 0
        %598 = vmatpush1.bf16.msra.mxu0 %v581
        %599 = vmatprep.subr.bf16.mxu0 0
        %600 = vmatpush2.bf16.msra.mxu0 0
        %601 = vmatprep.subr.bf16.mxu0 0
        %602 = vmatpush2.bf16.msra.mxu0 0
        %603 = vmatprep.subr.bf16.mxu0 0
        %604 = vmatpush2.bf16.msra.mxu0 0
        %605 = vmatprep.subr.bf16.mxu0 0
        %606 = vmatpush2.bf16.msra.mxu0 0
        %607 = vmatprep.subr.bf16.mxu0 0
        %608 = vmatpush2.bf16.msra.mxu0 0
        %609 = vmatprep.subr.bf16.mxu0 0
        %610 = vmatpush2.bf16.msra.mxu0 0
        %611 = vmatprep.subr.bf16.mxu0 0
        %612 = vmatpush2.bf16.msra.mxu0 0
        %613 = vmatprep.subr.bf16.mxu0 0
        %614 = vmatpush2.bf16.msra.mxu0 0
        %615 = vmatprep.mubr.bf16.mxu0 0
        %616 = vmatmul.mubr.bf16.gmra.mxu0 %v579
        %v617 = vpop.f32.mrf.mxu0
        %v618 = vadd.f32 0.0, %v617
        %v619 = vpop.f32.mrf.mxu0
        %v620 = vpop.f32.mrf.mxu0
        %v621 = vadd.f32 0.0, %v620
        %v622 = vpop.f32.mrf.mxu0
        %623 = vdwg.mxu0
        %v624 = vadd.f32 %v563, %v618
        %v625 = vadd.f32 %v564, %v621
        %626 = vrot.lane.b32.xlu0 %v265, 119
        %v627 = vpop.permute.xlu0 %626
        %vm628 = vcmask 973824
        %v630 = vsel %vm628, %v627, 0
        %s631 = scalar_lea.vmem %s255, 48
        %v632 = vld [vmem:[%s631] sm:$0xf]
        %v633 = vld [vmem:[%s631 + $0x4] sm:$0xf]
        %v636 = vunpack.c.l.b16 %v632
        %v637 = vunpack.c.l.b16 %v633
        %v638 = vpack.c.b16 %v637, %v636
        %v640 = vsel %vm287, %v638, 0
        %v642 = vsel %vm291, %v630, 0
        %644 = vmatprep.subr.bf16.mxu0 0
        %645 = vmatpush1.bf16.msra.mxu0 0
        %646 = vmatprep.subr.bf16.mxu0 0
        %647 = vmatpush1.bf16.msra.mxu0 0
        %648 = vmatprep.subr.bf16.mxu0 0
        %649 = vmatpush1.bf16.msra.mxu0 0
        %650 = vmatprep.subr.bf16.mxu0 0
        %651 = vmatpush1.bf16.msra.mxu0 0
        %652 = vmatprep.subr.bf16.mxu0 0
        %653 = vmatpush1.bf16.msra.mxu0 0
        %654 = vmatprep.subr.bf16.mxu0 0
        %655 = vmatpush1.bf16.msra.mxu0 0
        %656 = vmatprep.subr.bf16.mxu0 0
        %657 = vmatpush1.bf16.msra.mxu0 0
        %658 = vmatprep.subr.bf16.mxu0 0
        %659 = vmatpush1.bf16.msra.mxu0 %v642
        %660 = vmatprep.subr.bf16.mxu0 0
        %661 = vmatpush2.bf16.msra.mxu0 0
        %662 = vmatprep.subr.bf16.mxu0 0
        %663 = vmatpush2.bf16.msra.mxu0 0
        %664 = vmatprep.subr.bf16.mxu0 0
        %665 = vmatpush2.bf16.msra.mxu0 0
        %666 = vmatprep.subr.bf16.mxu0 0
        %667 = vmatpush2.bf16.msra.mxu0 0
        %668 = vmatprep.subr.bf16.mxu0 0
        %669 = vmatpush2.bf16.msra.mxu0 0
        %670 = vmatprep.subr.bf16.mxu0 0
        %671 = vmatpush2.bf16.msra.mxu0 0
        %672 = vmatprep.subr.bf16.mxu0 0
        %673 = vmatpush2.bf16.msra.mxu0 0
        %674 = vmatprep.subr.bf16.mxu0 0
        %675 = vmatpush2.bf16.msra.mxu0 0
        %676 = vmatprep.mubr.bf16.mxu0 0
        %677 = vmatmul.mubr.bf16.gmra.mxu0 %v640
        %v678 = vpop.f32.mrf.mxu0
        %v679 = vadd.f32 0.0, %v678
        %v680 = vpop.f32.mrf.mxu0
        %v681 = vpop.f32.mrf.mxu0
        %v682 = vadd.f32 0.0, %v681
        %v683 = vpop.f32.mrf.mxu0
        %684 = vdwg.mxu0
        %v685 = vadd.f32 %v624, %v679
        %v686 = vadd.f32 %v625, %v682
        %687 = vrot.lane.b32.xlu0 %v265, 118
        %v688 = vpop.permute.xlu0 %687
        %vm689 = vcmask 965632
        %v691 = vsel %vm689, %v688, 0
        %s692 = scalar_lea.vmem %s255, 56
        %v693 = vld [vmem:[%s692] sm:$0xf]
        %v694 = vld [vmem:[%s692 + $0x4] sm:$0xf]
        %v697 = vunpack.c.l.b16 %v693
        %v698 = vunpack.c.l.b16 %v694
        %v699 = vpack.c.b16 %v698, %v697
        %v701 = vsel %vm287, %v699, 0
        %v703 = vsel %vm291, %v691, 0
        %705 = vmatprep.subr.bf16.mxu0 0
        %706 = vmatpush1.bf16.msra.mxu0 0
        %707 = vmatprep.subr.bf16.mxu0 0
        %708 = vmatpush1.bf16.msra.mxu0 0
        %709 = vmatprep.subr.bf16.mxu0 0
        %710 = vmatpush1.bf16.msra.mxu0 0
        %711 = vmatprep.subr.bf16.mxu0 0
        %712 = vmatpush1.bf16.msra.mxu0 0
        %713 = vmatprep.subr.bf16.mxu0 0
        %714 = vmatpush1.bf16.msra.mxu0 0
        %715 = vmatprep.subr.bf16.mxu0 0
        %716 = vmatpush1.bf16.msra.mxu0 0
        %717 = vmatprep.subr.bf16.mxu0 0
        %718 = vmatpush1.bf16.msra.mxu0 0
        %719 = vmatprep.subr.bf16.mxu0 0
        %720 = vmatpush1.bf16.msra.mxu0 %v703
        %721 = vmatprep.subr.bf16.mxu0 0
        %722 = vmatpush2.bf16.msra.mxu0 0
        %723 = vmatprep.subr.bf16.mxu0 0
        %724 = vmatpush2.bf16.msra.mxu0 0
        %725 = vmatprep.subr.bf16.mxu0 0
        %726 = vmatpush2.bf16.msra.mxu0 0
        %727 = vmatprep.subr.bf16.mxu0 0
        %728 = vmatpush2.bf16.msra.mxu0 0
        %729 = vmatprep.subr.bf16.mxu0 0
        %730 = vmatpush2.bf16.msra.mxu0 0
        %731 = vmatprep.subr.bf16.mxu0 0
        %732 = vmatpush2.bf16.msra.mxu0 0
        %733 = vmatprep.subr.bf16.mxu0 0
        %734 = vmatpush2.bf16.msra.mxu0 0
        %735 = vmatprep.subr.bf16.mxu0 0
        %736 = vmatpush2.bf16.msra.mxu0 0
        %737 = vmatprep.mubr.bf16.mxu0 0
        %738 = vmatmul.mubr.bf16.gmra.mxu0 %v701
        %v739 = vpop.f32.mrf.mxu0
        %v740 = vadd.f32 0.0, %v739
        %v741 = vpop.f32.mrf.mxu0
        %v742 = vpop.f32.mrf.mxu0
        %v743 = vadd.f32 0.0, %v742
        %v744 = vpop.f32.mrf.mxu0
        %745 = vdwg.mxu0
        %v746 = vadd.f32 %v685, %v740
        %v747 = vadd.f32 %v686, %v743
        %748 = vrot.lane.b32.xlu0 %v265, 117
        %v749 = vpop.permute.xlu0 %748
        %vm750 = vcmask 957440
        %v752 = vsel %vm750, %v749, 0
        %s753 = scalar_lea.vmem %s255, 64
        %v754 = vld [vmem:[%s753] sm:$0xf]
        %v755 = vld [vmem:[%s753 + $0x4] sm:$0xf]
        %v758 = vunpack.c.l.b16 %v754
        %v759 = vunpack.c.l.b16 %v755
        %v760 = vpack.c.b16 %v759, %v758
        %v762 = vsel %vm287, %v760, 0
        %v764 = vsel %vm291, %v752, 0
        %766 = vmatprep.subr.bf16.mxu0 0
        %767 = vmatpush1.bf16.msra.mxu0 0
        %768 = vmatprep.subr.bf16.mxu0 0
        %769 = vmatpush1.bf16.msra.mxu0 0
        %770 = vmatprep.subr.bf16.mxu0 0
        %771 = vmatpush1.bf16.msra.mxu0 0
        %772 = vmatprep.subr.bf16.mxu0 0
        %773 = vmatpush1.bf16.msra.mxu0 0
        %774 = vmatprep.subr.bf16.mxu0 0
        %775 = vmatpush1.bf16.msra.mxu0 0
        %776 = vmatprep.subr.bf16.mxu0 0
        %777 = vmatpush1.bf16.msra.mxu0 0
        %778 = vmatprep.subr.bf16.mxu0 0
        %779 = vmatpush1.bf16.msra.mxu0 0
        %780 = vmatprep.subr.bf16.mxu0 0
        %781 = vmatpush1.bf16.msra.mxu0 %v764
        %782 = vmatprep.subr.bf16.mxu0 0
        %783 = vmatpush2.bf16.msra.mxu0 0
        %784 = vmatprep.subr.bf16.mxu0 0
        %785 = vmatpush2.bf16.msra.mxu0 0
        %786 = vmatprep.subr.bf16.mxu0 0
        %787 = vmatpush2.bf16.msra.mxu0 0
        %788 = vmatprep.subr.bf16.mxu0 0
        %789 = vmatpush2.bf16.msra.mxu0 0
        %790 = vmatprep.subr.bf16.mxu0 0
        %791 = vmatpush2.bf16.msra.mxu0 0
        %792 = vmatprep.subr.bf16.mxu0 0
        %793 = vmatpush2.bf16.msra.mxu0 0
        %794 = vmatprep.subr.bf16.mxu0 0
        %795 = vmatpush2.bf16.msra.mxu0 0
        %796 = vmatprep.subr.bf16.mxu0 0
        %797 = vmatpush2.bf16.msra.mxu0 0
        %798 = vmatprep.mubr.bf16.mxu0 0
        %799 = vmatmul.mubr.bf16.gmra.mxu0 %v762
        %v800 = vpop.f32.mrf.mxu0
        %v801 = vadd.f32 0.0, %v800
        %v802 = vpop.f32.mrf.mxu0
        %v803 = vpop.f32.mrf.mxu0
        %v804 = vadd.f32 0.0, %v803
        %v805 = vpop.f32.mrf.mxu0
        %806 = vdwg.mxu0
        %v807 = vadd.f32 %v746, %v801
        %v808 = vadd.f32 %v747, %v804
        %v809 = vld [vmem:[%s260] sm:$0xff]
        %v810 = vld [vmem:[%s260 + $0x8] sm:$0xff]
        %812 = vset.pattern.permute.xlu0 0
        %813 = vperm.xlu0 %812, %v809
        %v814 = vpop.permute.xlu0 %813
        %817 = vset.pattern.permute.xlu0 0
        %818 = vperm.xlu0 %817, %v810
        %v819 = vpop.permute.xlu0 %818
        %v821 = vadd.f32 %v807, %v814
        %v822 = vadd.f32 %v808, %v819
        %vm823 = vcmp.ge.f32.partialorder %v821, 0.0
        %vm824 = vcmp.ge.f32.partialorder %v822, 0.0
        %v825 = vmul.f32 %v821, 0.2
        %v826 = vmul.f32 %v822, 0.2
        %v827 = vsel %vm823, %v821, %v825
        %v828 = vsel %vm824, %v822, %v826
        %v829 = vld [vmem:[%s3] sm:$0x1]
        %v831 = vlaneseq
        %v832 = vshrl.u32 %v831, 7
        %v833 = vsub.s32 0, %v832
        %v834 = vrot.slane %v829, %v833
        %v836 = vmul.f32 %v827, %v834
        %v837 = vmul.f32 %v828, %v834
        %v838 = vpack.c.bf16 %v837, %v836
        %v840 = vunpack.c.l.b16 %v838
        %v841 = vunpack.c.h.b16 %v838
        %v842 = vpack.c.b16 %v840, %v840
        %v843 = vpack.c.b16 %v841, %v841
        %846 = vst [vmem:[%s242] sm:$0xf] %v842
        %847 = vst [vmem:[%s242 + $0x4] sm:$0xf] %v843
        %s848 = sand.u32 %s141, 1
        %s849 = scalar_lea.sflag [#allocation3], %s848
        %s850 = sand.u32 %s141, 1
        %s851 = smul.addr %s850, 8
        %s852 = scalar_lea.vmem [#allocation2], %s851
        // Predicated region
        $region37: #{tpu_custom_call.1} parent=35 // pred_check
          %p853 = pneg %p151
        $region38: #{tpu_custom_call.1} parent=35 // pred_check_branch
          %855 = sbr.rel (%p853) target = $region40
        $region39: #{tpu_custom_call.1} parent=35 // pred_region
          %s857 = ssub.s32 128, 128
          %858 = vsyncadd %s849, %s857
          %s859 = smul.addr %s23, 2
          %s860 = smul.addr %s22, 4
          %s861 = sadd.s32 %s859, %s860
          %s862 = smul.addr %s861, 64
          %s863 = scalar_lea.hbm %s4, %s862
          %s864 = sshll.u32 %s852, 4
          %s865 = int_to_ptr.vmem [resolvable:$true] %s864
          %870 = dma.vmem_to_hbm [thread:$0]  %s865, 128, %s863, %s849, 64, 64, 4
        $region40: #{tpu_custom_call.1} parent=35 // pred_fallthru
          _
      $region36: #{tpu_custom_call.1} parent=5 // pred_fallthru
        _
      %p871 = scmp.le.s32.totalorder 2, %s13
      // Predicated region
      $region41: #{tpu_custom_call.1} parent=5 // pred_check
        %p872 = pneg %p871
      $region42: #{tpu_custom_call.1} parent=5 // pred_check_branch
        %874 = sbr.rel (%p872) target = $region44
      $region43: #{tpu_custom_call.1} parent=5 // pred_region
        %s875 = ssub.s32 %s13, 2
        // Predicated region
        $region45: #{tpu_custom_call.1} parent=43 // pred_check
          %p876 = pneg %p157
        $region46: #{tpu_custom_call.1} parent=43 // pred_check_branch
          %878 = sbr.rel (%p876) target = $region48
        $region47: #{tpu_custom_call.1} parent=43 // pred_region
          %s879 = sand.u32 %s142, 1
          %s880 = scalar_lea.sflag [#allocation3], %s879
          %s881 = sand.u32 %s142, 1
          %s882 = smul.addr %s881, 8
          %s883 = scalar_lea.vmem [#allocation2], %s882
          %884 = dma.done %s880, 128
        $region48: #{tpu_custom_call.1} parent=43 // pred_fallthru
          _
      $region44: #{tpu_custom_call.1} parent=5 // pred_fallthru
        _
    $region6: #{tpu_custom_call.1} parent=1 // loop_footer
      %s17 = sadd.s32 1, %s13
    $region7: #{tpu_custom_call.1} parent=1 // loop_footer_branch
      %12 = sbr.rel target = $region3
    $region8: #{tpu_custom_call.1} parent=1 // loop_exit
      _
    %885 = vsyncpa [#allocation3], 1
    %s886 = scalar_lea.sflag [#allocation3], 1
    %887 = vsyncpa %s886, 1

</llo_original>
